<compile_context>
chip_gen: v7x
topology: tpu7x:2x2x1
jax: 0.10.0
libtpu: 0.0.40
codegen_flags: <defaults>
</compile_context>

<pallas_src>
import functools

import jax
import jax.numpy as jnp
from jax.experimental import pallas as pl
from jax.experimental.pallas import tpu as pltpu


def _act(x, activation):
    if activation == "relu":
        return jnp.maximum(x, 0.0)
    if activation == "sigmoid":
        return jax.nn.sigmoid(x)
    raise ValueError(f"unsupported activation: {activation}")


def mlp_kernel(x_ref, w1_ref, b1_ref, w2_ref, b2_ref, w3_ref, b3_ref, o_ref,
               *, binary: bool, positive: bool, activation: str,
               small_k: bool, reduce_out: bool):
    # x_ref: (TB, D) natural layout.  One in-kernel transpose puts the batch on
    # lanes; the XLU is otherwise idle in this kernel so this is nearly free.
    xT = x_ref[...].T                      # (D, TB)
    w1 = w1_ref[...]                       # (H1, D)  (PyTorch (out, in) layout)
    b1 = b1_ref[...]                       # (H1, 1)

    # ---- Layer 1 ---------------------------------------------------------
    if small_k:
        # Degenerate K (input_dim small): D VPU broadcast-FMAs instead of a
        # padded MXU matmul.  (H1,1) * (1,TB) broadcasts -> (H1, TB).
        # (MXU alternative is neutral at this size; VALU has slack here.)
        h1 = b1
        for k in range(xT.shape[0]):       # unrolled at trace time (D is small)
            h1 = h1 + w1[:, k:k + 1] * xT[k:k + 1, :]
    else:
        h1 = jnp.dot(w1, xT, preferred_element_type=jnp.float32) + b1
    h1 = _act(h1, activation)              # (H1, TB), f32

    # ---- Layer 2 (the only real MXU matmul): bf16 operands, f32 accumulate.
    h2 = jnp.dot(w2_ref[...], h1.astype(jnp.bfloat16),
                 preferred_element_type=jnp.float32) + b2_ref[...]
    h2 = _act(h2, activation)              # (H2, TB), f32

    # ---- Layer 3 ---------------------------------------------------------
    if reduce_out:
        # O == 1: elementwise multiply + sublane (XLU) reduction -> (1, TB),
        # lane-dense for the output store.
        out = jnp.sum(w3_ref[...] * h2, axis=0, keepdims=True) + b3_ref[...]
    else:
        out = jnp.dot(w3_ref[...], h2, preferred_element_type=jnp.float32) + b3_ref[...]

    if binary:
        out = jax.nn.sigmoid(out)
    elif positive:
        out = jnp.maximum(out, 0.0)
    o_ref[...] = out.astype(o_ref.dtype)   # (O, TB), lane-dense when O == 1


def mlp_forward(x, params, *, binary=False, positive=False, activation="relu",
                max_tile_b=2048):
    """x: (B, D).  params in PyTorch Linear layout: w (out, in), b (out,)."""
    w1, b1, w2, b2, w3, b3 = params
    B, D = x.shape
    H1 = w1.shape[0]
    H2 = w2.shape[0]
    O = w3.shape[0]

    # tile_b scales with B: one full-array block (grid=1, no padding, no step
    # overhead) for small/medium B; 2048-wide tiles (multiple of 128) for large
    # B, where per-step work dominates the ~0.35us step overhead and the
    # "parallel" grid axis can use both v7x TensorCores.
    if B <= max_tile_b:
        tile_b, num_tiles, B_pad = B, 1, B
    else:
        tile_b = max_tile_b                 # multiple of 128
        num_tiles = pl.cdiv(B, tile_b)
        B_pad = num_tiles * tile_b

    x_in = x if B_pad == B else jnp.pad(x, ((0, B_pad - B), (0, 0)))

    # One-time weight prep (tiny, constant-folded under jit).
    b1c = b1.reshape(H1, 1)
    b2c = b2.reshape(H2, 1)
    b3c = b3.reshape(O, 1)
    w2b = w2.astype(jnp.bfloat16)          # bf16 MXU operand, f32 accumulation

    reduce_out = (O == 1)
    small_k = D <= 8
    # For the XLU-reduce path present w3 (1, H2) as a (H2, 1) column.
    w3_in = w3.reshape(H2, 1) if reduce_out else w3
    w3_block = (H2, 1) if reduce_out else (O, H2)

    kernel = functools.partial(
        mlp_kernel, binary=binary, positive=positive, activation=activation,
        small_k=small_k, reduce_out=reduce_out)

    result = pl.pallas_call(
        kernel,
        out_shape=jax.ShapeDtypeStruct((O, B_pad), x.dtype),
        grid_spec=pltpu.PrefetchScalarGridSpec(
            num_scalar_prefetch=0,
            grid=(num_tiles,),
            in_specs=[
                pl.BlockSpec((tile_b, D), lambda i: (i, 0)),   # x batch tile (natural layout)
                pl.BlockSpec((H1, D), lambda i: (0, 0)),       # w1 (grid-invariant)
                pl.BlockSpec((H1, 1), lambda i: (0, 0)),       # b1 column
                pl.BlockSpec((H2, H1), lambda i: (0, 0)),      # w2 bf16 (grid-invariant)
                pl.BlockSpec((H2, 1), lambda i: (0, 0)),       # b2 column
                pl.BlockSpec(w3_block, lambda i: (0, 0)),      # w3
                pl.BlockSpec((O, 1), lambda i: (0, 0)),        # b3
            ],
            out_specs=pl.BlockSpec((O, tile_b), lambda i: (0, i)),
        ),
        compiler_params=pltpu.CompilerParams(
            dimension_semantics=("parallel",)),
    )(x_in, w1, b1c, w2b, b2c, w3_in, b3c)

    out = result if B_pad == B else result[:, :B]
    if O == 1:
        return out.reshape(B, 1)           # (1, B) -> (B, 1): layout-preserving, free
    return out.T


def init_params(key, input_dim=2, hidden_num=128, output_dim=1):
    """PyTorch-Linear-style init: w (out, in), b (out,), uniform +-1/sqrt(fan_in)."""
    ks = jax.random.split(key, 6)

    def linear(kw, kb, fan_in, fan_out):
        bound = 1.0 / jnp.sqrt(jnp.float32(fan_in))
        w = jax.random.uniform(kw, (fan_out, fan_in), jnp.float32, -bound, bound)
        b = jax.random.uniform(kb, (fan_out,), jnp.float32, -bound, bound)
        return w, b

    w1, b1 = linear(ks[0], ks[1], input_dim, hidden_num)
    w2, b2 = linear(ks[2], ks[3], hidden_num, hidden_num // 2)
    w3, b3 = linear(ks[4], ks[5], hidden_num // 2, output_dim)
    return (w1, b1, w2, b2, w3, b3)


def mlp_reference(x, params, *, binary=False, positive=False, activation="relu"):
    w1, b1, w2, b2, w3, b3 = params
    act = (lambda v: jnp.maximum(v, 0.0)) if activation == "relu" else jax.nn.sigmoid
    h1 = act(x @ w1.T + b1)
    h2 = act(h1 @ w2.T + b2)
    out = h2 @ w3.T + b3
    if binary:
        out = jax.nn.sigmoid(out)
    elif positive:
        out = jnp.maximum(out, 0.0)
    return out


if __name__ == "__main__":
    key = jax.random.PRNGKey(0)
    k_x, k_p = jax.random.split(key)

    batch, input_dim, hidden_num, output_dim = 512, 2, 128, 1
    x = jax.random.normal(k_x, (batch, input_dim), jnp.float32)
    params = init_params(k_p, input_dim, hidden_num, output_dim)

    fwd = jax.jit(mlp_forward,
                  static_argnames=("binary", "positive", "activation", "max_tile_b"))

    # Default head (relu activations, raw output).
    out = jax.block_until_ready(fwd(x, params))
    ref = mlp_reference(x, params)
    assert out.shape == (batch, output_dim)
    # bf16 layer-2 operands -> loosened tolerance vs the f32 reference.
    assert jnp.allclose(out, ref, atol=5e-2, rtol=5e-2), float(jnp.max(jnp.abs(out - ref)))

    # Binary head (sigmoid on the output).
    out_b = jax.block_until_ready(fwd(x, params, binary=True))
    ref_b = mlp_reference(x, params, binary=True)
    assert jnp.allclose(out_b, ref_b, atol=5e-2, rtol=5e-2), float(jnp.max(jnp.abs(out_b - ref_b)))

    print("KERNEL_OK")
</pallas_src>

<mosaic_0001>
module attributes {stable_mosaic.version = 11 : i64} {
  func.func @mlp_kernel(%arg0: i32, %arg1: memref<512x2xf32, #tpu.memory_space<vmem>>, %arg2: memref<128x2xf32, #tpu.memory_space<vmem>>, %arg3: memref<128x1xf32, #tpu.memory_space<vmem>>, %arg4: memref<64x128xbf16, #tpu.memory_space<vmem>>, %arg5: memref<64x1xf32, #tpu.memory_space<vmem>>, %arg6: memref<64x1xf32, #tpu.memory_space<vmem>>, %arg7: memref<1x1xf32, #tpu.memory_space<vmem>>, %arg8: memref<1x512xf32, #tpu.memory_space<vmem>>) attributes {dimension_semantics = [#tpu.dimension_semantics<parallel>], iteration_bounds = array<i64: 1>, scalar_prefetch = 0 : i64, scratch_operands = 0 : i64, tpu.core_type = #tpu.core_type<tc>, window_params = [{transform_indices = @transform_0, window_bounds = array<i64: 512, 2>}, {pipeline_mode = #tpu.pipeline_mode<synchronous>, transform_indices = @transform_1, window_bounds = array<i64: 128, 2>}, {pipeline_mode = #tpu.pipeline_mode<synchronous>, transform_indices = @transform_2, window_bounds = array<i64: 128, 1>}, {pipeline_mode = #tpu.pipeline_mode<synchronous>, transform_indices = @transform_3, window_bounds = array<i64: 64, 128>}, {pipeline_mode = #tpu.pipeline_mode<synchronous>, transform_indices = @transform_4, window_bounds = array<i64: 64, 1>}, {pipeline_mode = #tpu.pipeline_mode<synchronous>, transform_indices = @transform_5, window_bounds = array<i64: 64, 1>}, {pipeline_mode = #tpu.pipeline_mode<synchronous>, transform_indices = @transform_6, window_bounds = array<i64: 1, 1>}, {transform_indices = @transform_7, window_bounds = array<i64: 1, 512>}]} {
    %c0 = arith.constant 0 : index
    %c0_0 = arith.constant 0 : index
    %0 = vector.load %arg1[%c0, %c0_0] : memref<512x2xf32, #tpu.memory_space<vmem>>, vector<512x2xf32>
    %1 = tpu.transpose %0, [1, 0] : vector<512x2xf32> -> vector<2x512xf32>
    %c0_1 = arith.constant 0 : index
    %c0_2 = arith.constant 0 : index
    %2 = vector.load %arg2[%c0_1, %c0_2] : memref<128x2xf32, #tpu.memory_space<vmem>>, vector<128x2xf32>
    %c0_3 = arith.constant 0 : index
    %c0_4 = arith.constant 0 : index
    %3 = vector.load %arg3[%c0_3, %c0_4] : memref<128x1xf32, #tpu.memory_space<vmem>>, vector<128x1xf32>
    %4 = vector.extract_strided_slice %2 {offsets = [0, 0], sizes = [128, 1], strides = [1, 1]} : vector<128x2xf32> to vector<128x1xf32>
    %5 = vector.extract_strided_slice %1 {offsets = [0, 0], sizes = [1, 512], strides = [1, 1]} : vector<2x512xf32> to vector<1x512xf32>
    %6 = vector.broadcast %4 : vector<128x1xf32> to vector<128x512xf32>
    %7 = vector.broadcast %5 : vector<1x512xf32> to vector<128x512xf32>
    %8 = arith.mulf %6, %7 : vector<128x512xf32>
    %9 = vector.broadcast %3 : vector<128x1xf32> to vector<128x512xf32>
    %10 = arith.addf %9, %8 : vector<128x512xf32>
    %11 = vector.extract_strided_slice %2 {offsets = [0, 1], sizes = [128, 1], strides = [1, 1]} : vector<128x2xf32> to vector<128x1xf32>
    %12 = vector.extract_strided_slice %1 {offsets = [1, 0], sizes = [1, 512], strides = [1, 1]} : vector<2x512xf32> to vector<1x512xf32>
    %13 = vector.broadcast %11 : vector<128x1xf32> to vector<128x512xf32>
    %14 = vector.broadcast %12 : vector<1x512xf32> to vector<128x512xf32>
    %15 = arith.mulf %13, %14 : vector<128x512xf32>
    %16 = arith.addf %10, %15 : vector<128x512xf32>
    %cst = arith.constant 0.000000e+00 : f32
    %17 = vector.broadcast %cst : f32 to vector<128x512xf32>
    %18 = arith.maximumf %16, %17 : vector<128x512xf32>
    %c0_5 = arith.constant 0 : index
    %c0_6 = arith.constant 0 : index
    %19 = vector.load %arg4[%c0_5, %c0_6] : memref<64x128xbf16, #tpu.memory_space<vmem>>, vector<64x128xbf16>
    %20 = arith.truncf %18 : vector<128x512xf32> to vector<128x512xbf16>
    %cst_7 = arith.constant dense<0.000000e+00> : vector<64x512xf32>
    %21 = tpu.matmul %19, %20, %cst_7 {dimension_numbers = #tpu.dot_dimension_numbers<[1], [0], [0], [1], [0, 0, 1, 1], [], []>} : vector<64x128xbf16>, vector<128x512xbf16>, vector<64x512xf32> -> vector<64x512xf32>
    %c0_8 = arith.constant 0 : index
    %c0_9 = arith.constant 0 : index
    %22 = vector.load %arg5[%c0_8, %c0_9] : memref<64x1xf32, #tpu.memory_space<vmem>>, vector<64x1xf32>
    %23 = vector.broadcast %22 : vector<64x1xf32> to vector<64x512xf32>
    %24 = arith.addf %21, %23 : vector<64x512xf32>
    %cst_10 = arith.constant 0.000000e+00 : f32
    %25 = vector.broadcast %cst_10 : f32 to vector<64x512xf32>
    %26 = arith.maximumf %24, %25 : vector<64x512xf32>
    %c0_11 = arith.constant 0 : index
    %c0_12 = arith.constant 0 : index
    %27 = vector.load %arg6[%c0_11, %c0_12] : memref<64x1xf32, #tpu.memory_space<vmem>>, vector<64x1xf32>
    %28 = vector.broadcast %27 : vector<64x1xf32> to vector<64x512xf32>
    %29 = arith.mulf %28, %26 : vector<64x512xf32>
    %cst_13 = arith.constant dense<0.000000e+00> : vector<512xf32>
    %30 = vector.multi_reduction <add>, %29, %cst_13 [0] : vector<64x512xf32> to vector<512xf32>
    %31 = vector.shape_cast %30 : vector<512xf32> to vector<1x512xf32>
    %c0_14 = arith.constant 0 : index
    %c0_15 = arith.constant 0 : index
    %32 = vector.load %arg7[%c0_14, %c0_15] : memref<1x1xf32, #tpu.memory_space<vmem>>, vector<1x1xf32>
    %33 = vector.broadcast %32 : vector<1x1xf32> to vector<1x512xf32>
    %34 = arith.addf %31, %33 : vector<1x512xf32>
    %c0_16 = arith.constant 0 : index
    %c0_17 = arith.constant 0 : index
    %35 = vector.load %arg8[%c0_16, %c0_17] : memref<1x512xf32, #tpu.memory_space<vmem>>, vector<1x512xf32>
    tpu.vector_store %arg8[%c0_16, %c0_17], %34 {strides = array<i32>} : memref<1x512xf32, #tpu.memory_space<vmem>>, vector<1x512xf32>,
    return
  }
  func.func @transform_0(%arg0: i32) -> (i32, i32) {
    %c0_i32 = arith.constant 0 : i32
    %c0_i32_0 = arith.constant 0 : i32
    return %arg0, %c0_i32 : i32, i32
  }
  func.func @transform_1(%arg0: i32) -> (i32, i32) {
    %c0_i32 = arith.constant 0 : i32
    %c0_i32_0 = arith.constant 0 : i32
    %c0_i32_1 = arith.constant 0 : i32
    return %c0_i32, %c0_i32_0 : i32, i32
  }
  func.func @transform_2(%arg0: i32) -> (i32, i32) {
    %c0_i32 = arith.constant 0 : i32
    %c0_i32_0 = arith.constant 0 : i32
    %c0_i32_1 = arith.constant 0 : i32
    return %c0_i32, %c0_i32_0 : i32, i32
  }
  func.func @transform_3(%arg0: i32) -> (i32, i32) {
    %c0_i32 = arith.constant 0 : i32
    %c0_i32_0 = arith.constant 0 : i32
    %c0_i32_1 = arith.constant 0 : i32
    return %c0_i32, %c0_i32_0 : i32, i32
  }
  func.func @transform_4(%arg0: i32) -> (i32, i32) {
    %c0_i32 = arith.constant 0 : i32
    %c0_i32_0 = arith.constant 0 : i32
    %c0_i32_1 = arith.constant 0 : i32
    return %c0_i32, %c0_i32_0 : i32, i32
  }
  func.func @transform_5(%arg0: i32) -> (i32, i32) {
    %c0_i32 = arith.constant 0 : i32
    %c0_i32_0 = arith.constant 0 : i32
    %c0_i32_1 = arith.constant 0 : i32
    return %c0_i32, %c0_i32_0 : i32, i32
  }
  func.func @transform_6(%arg0: i32) -> (i32, i32) {
    %c0_i32 = arith.constant 0 : i32
    %c0_i32_0 = arith.constant 0 : i32
    %c0_i32_1 = arith.constant 0 : i32
    return %c0_i32, %c0_i32_0 : i32, i32
  }
  func.func @transform_7(%arg0: i32) -> (i32, i32) {
    %c0_i32 = arith.constant 0 : i32
    %c0_i32_0 = arith.constant 0 : i32
    return %c0_i32, %arg0 : i32, i32
  }
}

</mosaic_0001>

<llo_original>
// kernel: mlp_forward.1
$region0: #{mlp_forward.1}
  #allocation0 [shape = 'u32[]', space=smem, size = 0x4, offset = 0x4, fixed_abs, tag = 'smem constant byte address 0x4 - core index']
  #allocation1 [shape = 'u32[144,128]{1,0:T(1,128)}', space=vmem, size = 0x12000, scoped, tag = 'internal scratch']
  #allocation2 [shape = 'f32[1,1]{1,0:T(1,128)S(1)}', space=vmem, size = 0x200, scoped, tag = 'scoped memory for mlp_forward.1']
  %s0 = inlined_call_operand.vmem [shape: f32[512,2], index: 0, kind: input, shape index: {}]
  %s1 = inlined_call_operand.vmem [shape: f32[128,2], index: 1, kind: input, shape index: {}]
  %s2 = inlined_call_operand.vmem [shape: f32[128,1], index: 2, kind: input, shape index: {}]
  %s3 = inlined_call_operand.vmem [shape: bf16[64,128], index: 3, kind: input, shape index: {}]
  %s4 = inlined_call_operand.vmem [shape: f32[64,1], index: 4, kind: input, shape index: {}]
  %s5 = inlined_call_operand.vmem [shape: f32[64,1], index: 5, kind: input, shape index: {}]
  %s6 = inlined_call_operand.<no memory space> [shape: f32[1,1], index: 6, kind: input, shape index: {}]
  %s7 = inlined_call_operand.hbm [shape: f32[1,512], index: 7, kind: output, shape index: {}]
  %s8 = sld [smem:[#allocation0]]
  $region38: #{mlp_forward.1} parent=0
    _
  %s10 = ssub.s32 1, %s8
  %s11 = scalar_select 0, %s10, %s8
  %v12 = vstv %s6
  %13 = vst [vmem:[#allocation2] sm:$0x1] %v12
  $region1: #{mlp_forward.1} parent=0
    #allocation3 [shape = 'u8[2048]{0}', space=vmem, size = 0x800, scoped, tag = 'output window, operand 0, single buffered']
    #allocation4 [shape = 's32[1]{0}', space=sflag, size = 0x4, scoped, tag = 'scoped memory for mlp_forward.1']
    %14 = vsyncpa [#allocation4], 0
    // Predicated region
    $region2: #{mlp_forward.1} parent=1 // pred_check
      _
    $region3: #{mlp_forward.1} parent=1 // pred_check_branch
      %16 = sbr.rel (0) target = $region5
    $region4: #{mlp_forward.1} parent=1 // pred_region
      _
    $region5: #{mlp_forward.1} parent=1 // pred_fallthru
      _
    // Predicated region
    $region6: #{mlp_forward.1} parent=1 // pred_check
      _
    $region7: #{mlp_forward.1} parent=1 // pred_check_branch
      %18 = sbr.rel (0) target = $region9
    $region8: #{mlp_forward.1} parent=1 // pred_region
      _
    $region9: #{mlp_forward.1} parent=1 // pred_fallthru
      _
    // Predicated region
    $region10: #{mlp_forward.1} parent=1 // pred_check
      _
    $region11: #{mlp_forward.1} parent=1 // pred_check_branch
      %20 = sbr.rel (0) target = $region13
    $region12: #{mlp_forward.1} parent=1 // pred_region
      _
    $region13: #{mlp_forward.1} parent=1 // pred_fallthru
      _
    // Predicated region
    $region14: #{mlp_forward.1} parent=1 // pred_check
      _
    $region15: #{mlp_forward.1} parent=1 // pred_check_branch
      %22 = sbr.rel (0) target = $region17
    $region16: #{mlp_forward.1} parent=1 // pred_region
      _
    $region17: #{mlp_forward.1} parent=1 // pred_fallthru
      _
    // Predicated region
    $region18: #{mlp_forward.1} parent=1 // pred_check
      _
    $region19: #{mlp_forward.1} parent=1 // pred_check_branch
      %24 = sbr.rel (0) target = $region21
    $region20: #{mlp_forward.1} parent=1 // pred_region
      _
    $region21: #{mlp_forward.1} parent=1 // pred_fallthru
      _
    // Predicated region
    $region22: #{mlp_forward.1} parent=1 // pred_check
      _
    $region23: #{mlp_forward.1} parent=1 // pred_check_branch
      %26 = sbr.rel (0) target = $region25
    $region24: #{mlp_forward.1} parent=1 // pred_region
      _
    $region25: #{mlp_forward.1} parent=1 // pred_fallthru
      _
    // Predicated region
    $region26: #{mlp_forward.1} parent=1 // pred_check
      _
    $region27: #{mlp_forward.1} parent=1 // pred_check_branch
      %28 = sbr.rel (0) target = $region29
    $region28: #{mlp_forward.1} parent=1 // pred_region
      _
    $region29: #{mlp_forward.1} parent=1 // pred_fallthru
      _
    %v30 = vld [vmem:[%s0] sm:$0xff]
    %v31 = vld [vmem:[%s0 + $0x8] sm:$0xff]
    %v32 = vld [vmem:[%s0 + $0x10] sm:$0xff]
    %v33 = vld [vmem:[%s0 + $0x18] sm:$0xff]
    %v34 = vld [vmem:[%s0 + $0x20] sm:$0xff]
    %v35 = vld [vmem:[%s0 + $0x28] sm:$0xff]
    %v36 = vld [vmem:[%s0 + $0x30] sm:$0xff]
    %v37 = vld [vmem:[%s0 + $0x38] sm:$0xff]
    %v38 = vld [vmem:[%s0 + $0x40] sm:$0xff]
    %v39 = vld [vmem:[%s0 + $0x48] sm:$0xff]
    %v40 = vld [vmem:[%s0 + $0x50] sm:$0xff]
    %v41 = vld [vmem:[%s0 + $0x58] sm:$0xff]
    %v42 = vld [vmem:[%s0 + $0x60] sm:$0xff]
    %v43 = vld [vmem:[%s0 + $0x68] sm:$0xff]
    %v44 = vld [vmem:[%s0 + $0x70] sm:$0xff]
    %v45 = vld [vmem:[%s0 + $0x78] sm:$0xff]
    %v46 = vld [vmem:[%s0 + $0x80] sm:$0xff]
    %v47 = vld [vmem:[%s0 + $0x88] sm:$0xff]
    %v48 = vld [vmem:[%s0 + $0x90] sm:$0xff]
    %v49 = vld [vmem:[%s0 + $0x98] sm:$0xff]
    %v50 = vld [vmem:[%s0 + $0xa0] sm:$0xff]
    %v51 = vld [vmem:[%s0 + $0xa8] sm:$0xff]
    %v52 = vld [vmem:[%s0 + $0xb0] sm:$0xff]
    %v53 = vld [vmem:[%s0 + $0xb8] sm:$0xff]
    %v54 = vld [vmem:[%s0 + $0xc0] sm:$0xff]
    %v55 = vld [vmem:[%s0 + $0xc8] sm:$0xff]
    %v56 = vld [vmem:[%s0 + $0xd0] sm:$0xff]
    %v57 = vld [vmem:[%s0 + $0xd8] sm:$0xff]
    %v58 = vld [vmem:[%s0 + $0xe0] sm:$0xff]
    %v59 = vld [vmem:[%s0 + $0xe8] sm:$0xff]
    %v60 = vld [vmem:[%s0 + $0xf0] sm:$0xff]
    %v61 = vld [vmem:[%s0 + $0xf8] sm:$0xff]
    %v62 = vld [vmem:[%s0 + $0x100] sm:$0xff]
    %v63 = vld [vmem:[%s0 + $0x108] sm:$0xff]
    %v64 = vld [vmem:[%s0 + $0x110] sm:$0xff]
    %v65 = vld [vmem:[%s0 + $0x118] sm:$0xff]
    %v66 = vld [vmem:[%s0 + $0x120] sm:$0xff]
    %v67 = vld [vmem:[%s0 + $0x128] sm:$0xff]
    %v68 = vld [vmem:[%s0 + $0x130] sm:$0xff]
    %v69 = vld [vmem:[%s0 + $0x138] sm:$0xff]
    %v70 = vld [vmem:[%s0 + $0x140] sm:$0xff]
    %v71 = vld [vmem:[%s0 + $0x148] sm:$0xff]
    %v72 = vld [vmem:[%s0 + $0x150] sm:$0xff]
    %v73 = vld [vmem:[%s0 + $0x158] sm:$0xff]
    %v74 = vld [vmem:[%s0 + $0x160] sm:$0xff]
    %v75 = vld [vmem:[%s0 + $0x168] sm:$0xff]
    %v76 = vld [vmem:[%s0 + $0x170] sm:$0xff]
    %v77 = vld [vmem:[%s0 + $0x178] sm:$0xff]
    %v78 = vld [vmem:[%s0 + $0x180] sm:$0xff]
    %v79 = vld [vmem:[%s0 + $0x188] sm:$0xff]
    %v80 = vld [vmem:[%s0 + $0x190] sm:$0xff]
    %v81 = vld [vmem:[%s0 + $0x198] sm:$0xff]
    %v82 = vld [vmem:[%s0 + $0x1a0] sm:$0xff]
    %v83 = vld [vmem:[%s0 + $0x1a8] sm:$0xff]
    %v84 = vld [vmem:[%s0 + $0x1b0] sm:$0xff]
    %v85 = vld [vmem:[%s0 + $0x1b8] sm:$0xff]
    %v86 = vld [vmem:[%s0 + $0x1c0] sm:$0xff]
    %v87 = vld [vmem:[%s0 + $0x1c8] sm:$0xff]
    %v88 = vld [vmem:[%s0 + $0x1d0] sm:$0xff]
    %v89 = vld [vmem:[%s0 + $0x1d8] sm:$0xff]
    %v90 = vld [vmem:[%s0 + $0x1e0] sm:$0xff]
    %v91 = vld [vmem:[%s0 + $0x1e8] sm:$0xff]
    %v92 = vld [vmem:[%s0 + $0x1f0] sm:$0xff]
    %v93 = vld [vmem:[%s0 + $0x1f8] sm:$0xff]
    %94 = vxpose.xlu0.b32.start [1/16] %v30, 128
    %95 = vxpose.xlu0.b32.cont [2/16] %v31, 128
    %96 = vxpose.xlu0.b32.cont [3/16] %v32, 128
    %97 = vxpose.xlu0.b32.cont [4/16] %v33, 128
    %98 = vxpose.xlu0.b32.cont [5/16] %v34, 128
    %99 = vxpose.xlu0.b32.cont [6/16] %v35, 128
    %100 = vxpose.xlu0.b32.cont [7/16] %v36, 128
    %101 = vxpose.xlu0.b32.cont [8/16] %v37, 128
    %102 = vxpose.xlu0.b32.cont [9/16] %v38, 128
    %103 = vxpose.xlu0.b32.cont [10/16] %v39, 128
    %104 = vxpose.xlu0.b32.cont [11/16] %v40, 128
    %105 = vxpose.xlu0.b32.cont [12/16] %v41, 128
    %106 = vxpose.xlu0.b32.cont [13/16] %v42, 128
    %107 = vxpose.xlu0.b32.cont [14/16] %v43, 128
    %108 = vxpose.xlu0.b32.cont [15/16] %v44, 128
    %109 = vxpose.xlu0.b32.end [16/16] %v45, 128
    %v110 = vpop.trf.xlu0
    %v111 = vpop.trf.xlu0
    %v112 = vpop.trf.xlu0
    %v113 = vpop.trf.xlu0
    %v114 = vpop.trf.xlu0
    %v115 = vpop.trf.xlu0
    %v116 = vpop.trf.xlu0
    %v117 = vpop.trf.xlu0
    %v118 = vpop.trf.xlu0
    %v119 = vpop.trf.xlu0
    %v120 = vpop.trf.xlu0
    %v121 = vpop.trf.xlu0
    %v122 = vpop.trf.xlu0
    %v123 = vpop.trf.xlu0
    %v124 = vpop.trf.xlu0
    %v125 = vpop.trf.xlu0
    %126 = vxpose.xlu0.b32.start [1/16] %v46, 128
    %127 = vxpose.xlu0.b32.cont [2/16] %v47, 128
    %128 = vxpose.xlu0.b32.cont [3/16] %v48, 128
    %129 = vxpose.xlu0.b32.cont [4/16] %v49, 128
    %130 = vxpose.xlu0.b32.cont [5/16] %v50, 128
    %131 = vxpose.xlu0.b32.cont [6/16] %v51, 128
    %132 = vxpose.xlu0.b32.cont [7/16] %v52, 128
    %133 = vxpose.xlu0.b32.cont [8/16] %v53, 128
    %134 = vxpose.xlu0.b32.cont [9/16] %v54, 128
    %135 = vxpose.xlu0.b32.cont [10/16] %v55, 128
    %136 = vxpose.xlu0.b32.cont [11/16] %v56, 128
    %137 = vxpose.xlu0.b32.cont [12/16] %v57, 128
    %138 = vxpose.xlu0.b32.cont [13/16] %v58, 128
    %139 = vxpose.xlu0.b32.cont [14/16] %v59, 128
    %140 = vxpose.xlu0.b32.cont [15/16] %v60, 128
    %141 = vxpose.xlu0.b32.end [16/16] %v61, 128
    %v142 = vpop.trf.xlu0
    %v143 = vpop.trf.xlu0
    %v144 = vpop.trf.xlu0
    %v145 = vpop.trf.xlu0
    %v146 = vpop.trf.xlu0
    %v147 = vpop.trf.xlu0
    %v148 = vpop.trf.xlu0
    %v149 = vpop.trf.xlu0
    %v150 = vpop.trf.xlu0
    %v151 = vpop.trf.xlu0
    %v152 = vpop.trf.xlu0
    %v153 = vpop.trf.xlu0
    %v154 = vpop.trf.xlu0
    %v155 = vpop.trf.xlu0
    %v156 = vpop.trf.xlu0
    %v157 = vpop.trf.xlu0
    %158 = vxpose.xlu0.b32.start [1/16] %v62, 128
    %159 = vxpose.xlu0.b32.cont [2/16] %v63, 128
    %160 = vxpose.xlu0.b32.cont [3/16] %v64, 128
    %161 = vxpose.xlu0.b32.cont [4/16] %v65, 128
    %162 = vxpose.xlu0.b32.cont [5/16] %v66, 128
    %163 = vxpose.xlu0.b32.cont [6/16] %v67, 128
    %164 = vxpose.xlu0.b32.cont [7/16] %v68, 128
    %165 = vxpose.xlu0.b32.cont [8/16] %v69, 128
    %166 = vxpose.xlu0.b32.cont [9/16] %v70, 128
    %167 = vxpose.xlu0.b32.cont [10/16] %v71, 128
    %168 = vxpose.xlu0.b32.cont [11/16] %v72, 128
    %169 = vxpose.xlu0.b32.cont [12/16] %v73, 128
    %170 = vxpose.xlu0.b32.cont [13/16] %v74, 128
    %171 = vxpose.xlu0.b32.cont [14/16] %v75, 128
    %172 = vxpose.xlu0.b32.cont [15/16] %v76, 128
    %173 = vxpose.xlu0.b32.end [16/16] %v77, 128
    %v174 = vpop.trf.xlu0
    %v175 = vpop.trf.xlu0
    %v176 = vpop.trf.xlu0
    %v177 = vpop.trf.xlu0
    %v178 = vpop.trf.xlu0
    %v179 = vpop.trf.xlu0
    %v180 = vpop.trf.xlu0
    %v181 = vpop.trf.xlu0
    %v182 = vpop.trf.xlu0
    %v183 = vpop.trf.xlu0
    %v184 = vpop.trf.xlu0
    %v185 = vpop.trf.xlu0
    %v186 = vpop.trf.xlu0
    %v187 = vpop.trf.xlu0
    %v188 = vpop.trf.xlu0
    %v189 = vpop.trf.xlu0
    %190 = vxpose.xlu0.b32.start [1/16] %v78, 128
    %191 = vxpose.xlu0.b32.cont [2/16] %v79, 128
    %192 = vxpose.xlu0.b32.cont [3/16] %v80, 128
    %193 = vxpose.xlu0.b32.cont [4/16] %v81, 128
    %194 = vxpose.xlu0.b32.cont [5/16] %v82, 128
    %195 = vxpose.xlu0.b32.cont [6/16] %v83, 128
    %196 = vxpose.xlu0.b32.cont [7/16] %v84, 128
    %197 = vxpose.xlu0.b32.cont [8/16] %v85, 128
    %198 = vxpose.xlu0.b32.cont [9/16] %v86, 128
    %199 = vxpose.xlu0.b32.cont [10/16] %v87, 128
    %200 = vxpose.xlu0.b32.cont [11/16] %v88, 128
    %201 = vxpose.xlu0.b32.cont [12/16] %v89, 128
    %202 = vxpose.xlu0.b32.cont [13/16] %v90, 128
    %203 = vxpose.xlu0.b32.cont [14/16] %v91, 128
    %204 = vxpose.xlu0.b32.cont [15/16] %v92, 128
    %205 = vxpose.xlu0.b32.end [16/16] %v93, 128
    %v206 = vpop.trf.xlu0
    %v207 = vpop.trf.xlu0
    %v208 = vpop.trf.xlu0
    %v209 = vpop.trf.xlu0
    %v210 = vpop.trf.xlu0
    %v211 = vpop.trf.xlu0
    %v212 = vpop.trf.xlu0
    %v213 = vpop.trf.xlu0
    %v214 = vpop.trf.xlu0
    %v215 = vpop.trf.xlu0
    %v216 = vpop.trf.xlu0
    %v217 = vpop.trf.xlu0
    %v218 = vpop.trf.xlu0
    %v219 = vpop.trf.xlu0
    %v220 = vpop.trf.xlu0
    %v221 = vpop.trf.xlu0
    %v222 = vld [vmem:[%s1] sm:$0xff]
    %v223 = vld [vmem:[%s1 + $0x8] sm:$0xff]
    %v224 = vld [vmem:[%s1 + $0x10] sm:$0xff]
    %v225 = vld [vmem:[%s1 + $0x18] sm:$0xff]
    %v226 = vld [vmem:[%s1 + $0x20] sm:$0xff]
    %v227 = vld [vmem:[%s1 + $0x28] sm:$0xff]
    %v228 = vld [vmem:[%s1 + $0x30] sm:$0xff]
    %v229 = vld [vmem:[%s1 + $0x38] sm:$0xff]
    %v230 = vld [vmem:[%s1 + $0x40] sm:$0xff]
    %v231 = vld [vmem:[%s1 + $0x48] sm:$0xff]
    %v232 = vld [vmem:[%s1 + $0x50] sm:$0xff]
    %v233 = vld [vmem:[%s1 + $0x58] sm:$0xff]
    %v234 = vld [vmem:[%s1 + $0x60] sm:$0xff]
    %v235 = vld [vmem:[%s1 + $0x68] sm:$0xff]
    %v236 = vld [vmem:[%s1 + $0x70] sm:$0xff]
    %v237 = vld [vmem:[%s1 + $0x78] sm:$0xff]
    %v238 = vld [vmem:[%s2] sm:$0xff]
    %v239 = vld [vmem:[%s2 + $0x8] sm:$0xff]
    %v240 = vld [vmem:[%s2 + $0x10] sm:$0xff]
    %v241 = vld [vmem:[%s2 + $0x18] sm:$0xff]
    %v242 = vld [vmem:[%s2 + $0x20] sm:$0xff]
    %v243 = vld [vmem:[%s2 + $0x28] sm:$0xff]
    %v244 = vld [vmem:[%s2 + $0x30] sm:$0xff]
    %v245 = vld [vmem:[%s2 + $0x38] sm:$0xff]
    %v246 = vld [vmem:[%s2 + $0x40] sm:$0xff]
    %v247 = vld [vmem:[%s2 + $0x48] sm:$0xff]
    %v248 = vld [vmem:[%s2 + $0x50] sm:$0xff]
    %v249 = vld [vmem:[%s2 + $0x58] sm:$0xff]
    %v250 = vld [vmem:[%s2 + $0x60] sm:$0xff]
    %v251 = vld [vmem:[%s2 + $0x68] sm:$0xff]
    %v252 = vld [vmem:[%s2 + $0x70] sm:$0xff]
    %v253 = vld [vmem:[%s2 + $0x78] sm:$0xff]
    %255 = vset.pattern.permute.xlu0 0
    %256 = vperm.xlu0 %255, %v222
    %v257 = vpop.permute.xlu0 %256
    %260 = vset.pattern.permute.xlu0 0
    %261 = vperm.xlu0 %260, %v223
    %v262 = vpop.permute.xlu0 %261
    %265 = vset.pattern.permute.xlu0 0
    %266 = vperm.xlu0 %265, %v224
    %v267 = vpop.permute.xlu0 %266
    %270 = vset.pattern.permute.xlu0 0
    %271 = vperm.xlu0 %270, %v225
    %v272 = vpop.permute.xlu0 %271
    %275 = vset.pattern.permute.xlu0 0
    %276 = vperm.xlu0 %275, %v226
    %v277 = vpop.permute.xlu0 %276
    %280 = vset.pattern.permute.xlu0 0
    %281 = vperm.xlu0 %280, %v227
    %v282 = vpop.permute.xlu0 %281
    %285 = vset.pattern.permute.xlu0 0
    %286 = vperm.xlu0 %285, %v228
    %v287 = vpop.permute.xlu0 %286
    %290 = vset.pattern.permute.xlu0 0
    %291 = vperm.xlu0 %290, %v229
    %v292 = vpop.permute.xlu0 %291
    %295 = vset.pattern.permute.xlu0 0
    %296 = vperm.xlu0 %295, %v230
    %v297 = vpop.permute.xlu0 %296
    %300 = vset.pattern.permute.xlu0 0
    %301 = vperm.xlu0 %300, %v231
    %v302 = vpop.permute.xlu0 %301
    %305 = vset.pattern.permute.xlu0 0
    %306 = vperm.xlu0 %305, %v232
    %v307 = vpop.permute.xlu0 %306
    %310 = vset.pattern.permute.xlu0 0
    %311 = vperm.xlu0 %310, %v233
    %v312 = vpop.permute.xlu0 %311
    %315 = vset.pattern.permute.xlu0 0
    %316 = vperm.xlu0 %315, %v234
    %v317 = vpop.permute.xlu0 %316
    %320 = vset.pattern.permute.xlu0 0
    %321 = vperm.xlu0 %320, %v235
    %v322 = vpop.permute.xlu0 %321
    %325 = vset.pattern.permute.xlu0 0
    %326 = vperm.xlu0 %325, %v236
    %v327 = vpop.permute.xlu0 %326
    %330 = vset.pattern.permute.xlu0 0
    %331 = vperm.xlu0 %330, %v237
    %v332 = vpop.permute.xlu0 %331
    %v334 = vlaneseq
    %v335 = vshrl.u32 %v334, 7
    %v336 = vsub.s32 0, %v335
    %v337 = vrot.slane %v110, %v336
    %v338 = vlaneseq
    %v339 = vshrl.u32 %v338, 7
    %v340 = vsub.s32 0, %v339
    %v341 = vrot.slane %v142, %v340
    %v342 = vlaneseq
    %v343 = vshrl.u32 %v342, 7
    %v344 = vsub.s32 0, %v343
    %v345 = vrot.slane %v174, %v344
    %v346 = vlaneseq
    %v347 = vshrl.u32 %v346, 7
    %v348 = vsub.s32 0, %v347
    %v349 = vrot.slane %v206, %v348
    %v350 = vmul.f32 %v257, %v337
    %v351 = vmul.f32 %v257, %v341
    %v352 = vmul.f32 %v257, %v345
    %v353 = vmul.f32 %v257, %v349
    %v354 = vmul.f32 %v262, %v337
    %v355 = vmul.f32 %v262, %v341
    %v356 = vmul.f32 %v262, %v345
    %v357 = vmul.f32 %v262, %v349
    %v358 = vmul.f32 %v267, %v337
    %v359 = vmul.f32 %v267, %v341
    %v360 = vmul.f32 %v267, %v345
    %v361 = vmul.f32 %v267, %v349
    %v362 = vmul.f32 %v272, %v337
    %v363 = vmul.f32 %v272, %v341
    %v364 = vmul.f32 %v272, %v345
    %v365 = vmul.f32 %v272, %v349
    %v366 = vmul.f32 %v277, %v337
    %v367 = vmul.f32 %v277, %v341
    %v368 = vmul.f32 %v277, %v345
    %v369 = vmul.f32 %v277, %v349
    %v370 = vmul.f32 %v282, %v337
    %v371 = vmul.f32 %v282, %v341
    %v372 = vmul.f32 %v282, %v345
    %v373 = vmul.f32 %v282, %v349
    %v374 = vmul.f32 %v287, %v337
    %v375 = vmul.f32 %v287, %v341
    %v376 = vmul.f32 %v287, %v345
    %v377 = vmul.f32 %v287, %v349
    %v378 = vmul.f32 %v292, %v337
    %v379 = vmul.f32 %v292, %v341
    %v380 = vmul.f32 %v292, %v345
    %v381 = vmul.f32 %v292, %v349
    %v382 = vmul.f32 %v297, %v337
    %v383 = vmul.f32 %v297, %v341
    %v384 = vmul.f32 %v297, %v345
    %v385 = vmul.f32 %v297, %v349
    %v386 = vmul.f32 %v302, %v337
    %v387 = vmul.f32 %v302, %v341
    %v388 = vmul.f32 %v302, %v345
    %v389 = vmul.f32 %v302, %v349
    %v390 = vmul.f32 %v307, %v337
    %v391 = vmul.f32 %v307, %v341
    %v392 = vmul.f32 %v307, %v345
    %v393 = vmul.f32 %v307, %v349
    %v394 = vmul.f32 %v312, %v337
    %v395 = vmul.f32 %v312, %v341
    %v396 = vmul.f32 %v312, %v345
    %v397 = vmul.f32 %v312, %v349
    %v398 = vmul.f32 %v317, %v337
    %v399 = vmul.f32 %v317, %v341
    %v400 = vmul.f32 %v317, %v345
    %v401 = vmul.f32 %v317, %v349
    %v402 = vmul.f32 %v322, %v337
    %v403 = vmul.f32 %v322, %v341
    %v404 = vmul.f32 %v322, %v345
    %v405 = vmul.f32 %v322, %v349
    %v406 = vmul.f32 %v327, %v337
    %v407 = vmul.f32 %v327, %v341
    %v408 = vmul.f32 %v327, %v345
    %v409 = vmul.f32 %v327, %v349
    %v410 = vmul.f32 %v332, %v337
    %v411 = vmul.f32 %v332, %v341
    %v412 = vmul.f32 %v332, %v345
    %v413 = vmul.f32 %v332, %v349
    %415 = vset.pattern.permute.xlu0 0
    %416 = vperm.xlu0 %415, %v238
    %v417 = vpop.permute.xlu0 %416
    %420 = vset.pattern.permute.xlu0 0
    %421 = vperm.xlu0 %420, %v239
    %v422 = vpop.permute.xlu0 %421
    %425 = vset.pattern.permute.xlu0 0
    %426 = vperm.xlu0 %425, %v240
    %v427 = vpop.permute.xlu0 %426
    %430 = vset.pattern.permute.xlu0 0
    %431 = vperm.xlu0 %430, %v241
    %v432 = vpop.permute.xlu0 %431
    %435 = vset.pattern.permute.xlu0 0
    %436 = vperm.xlu0 %435, %v242
    %v437 = vpop.permute.xlu0 %436
    %440 = vset.pattern.permute.xlu0 0
    %441 = vperm.xlu0 %440, %v243
    %v442 = vpop.permute.xlu0 %441
    %445 = vset.pattern.permute.xlu0 0
    %446 = vperm.xlu0 %445, %v244
    %v447 = vpop.permute.xlu0 %446
    %450 = vset.pattern.permute.xlu0 0
    %451 = vperm.xlu0 %450, %v245
    %v452 = vpop.permute.xlu0 %451
    %455 = vset.pattern.permute.xlu0 0
    %456 = vperm.xlu0 %455, %v246
    %v457 = vpop.permute.xlu0 %456
    %460 = vset.pattern.permute.xlu0 0
    %461 = vperm.xlu0 %460, %v247
    %v462 = vpop.permute.xlu0 %461
    %465 = vset.pattern.permute.xlu0 0
    %466 = vperm.xlu0 %465, %v248
    %v467 = vpop.permute.xlu0 %466
    %470 = vset.pattern.permute.xlu0 0
    %471 = vperm.xlu0 %470, %v249
    %v472 = vpop.permute.xlu0 %471
    %475 = vset.pattern.permute.xlu0 0
    %476 = vperm.xlu0 %475, %v250
    %v477 = vpop.permute.xlu0 %476
    %480 = vset.pattern.permute.xlu0 0
    %481 = vperm.xlu0 %480, %v251
    %v482 = vpop.permute.xlu0 %481
    %485 = vset.pattern.permute.xlu0 0
    %486 = vperm.xlu0 %485, %v252
    %v487 = vpop.permute.xlu0 %486
    %490 = vset.pattern.permute.xlu0 0
    %491 = vperm.xlu0 %490, %v253
    %v492 = vpop.permute.xlu0 %491
    %v494 = vadd.f32 %v417, %v350
    %v495 = vadd.f32 %v417, %v351
    %v496 = vadd.f32 %v417, %v352
    %v497 = vadd.f32 %v417, %v353
    %v498 = vadd.f32 %v422, %v354
    %v499 = vadd.f32 %v422, %v355
    %v500 = vadd.f32 %v422, %v356
    %v501 = vadd.f32 %v422, %v357
    %v502 = vadd.f32 %v427, %v358
    %v503 = vadd.f32 %v427, %v359
    %v504 = vadd.f32 %v427, %v360
    %v505 = vadd.f32 %v427, %v361
    %v506 = vadd.f32 %v432, %v362
    %v507 = vadd.f32 %v432, %v363
    %v508 = vadd.f32 %v432, %v364
    %v509 = vadd.f32 %v432, %v365
    %v510 = vadd.f32 %v437, %v366
    %v511 = vadd.f32 %v437, %v367
    %v512 = vadd.f32 %v437, %v368
    %v513 = vadd.f32 %v437, %v369
    %v514 = vadd.f32 %v442, %v370
    %v515 = vadd.f32 %v442, %v371
    %v516 = vadd.f32 %v442, %v372
    %v517 = vadd.f32 %v442, %v373
    %v518 = vadd.f32 %v447, %v374
    %v519 = vadd.f32 %v447, %v375
    %v520 = vadd.f32 %v447, %v376
    %v521 = vadd.f32 %v447, %v377
    %v522 = vadd.f32 %v452, %v378
    %v523 = vadd.f32 %v452, %v379
    %v524 = vadd.f32 %v452, %v380
    %v525 = vadd.f32 %v452, %v381
    %v526 = vadd.f32 %v457, %v382
    %v527 = vadd.f32 %v457, %v383
    %v528 = vadd.f32 %v457, %v384
    %v529 = vadd.f32 %v457, %v385
    %v530 = vadd.f32 %v462, %v386
    %v531 = vadd.f32 %v462, %v387
    %v532 = vadd.f32 %v462, %v388
    %v533 = vadd.f32 %v462, %v389
    %v534 = vadd.f32 %v467, %v390
    %v535 = vadd.f32 %v467, %v391
    %v536 = vadd.f32 %v467, %v392
    %v537 = vadd.f32 %v467, %v393
    %v538 = vadd.f32 %v472, %v394
    %v539 = vadd.f32 %v472, %v395
    %v540 = vadd.f32 %v472, %v396
    %v541 = vadd.f32 %v472, %v397
    %v542 = vadd.f32 %v477, %v398
    %v543 = vadd.f32 %v477, %v399
    %v544 = vadd.f32 %v477, %v400
    %v545 = vadd.f32 %v477, %v401
    %v546 = vadd.f32 %v482, %v402
    %v547 = vadd.f32 %v482, %v403
    %v548 = vadd.f32 %v482, %v404
    %v549 = vadd.f32 %v482, %v405
    %v550 = vadd.f32 %v487, %v406
    %v551 = vadd.f32 %v487, %v407
    %v552 = vadd.f32 %v487, %v408
    %v553 = vadd.f32 %v487, %v409
    %v554 = vadd.f32 %v492, %v410
    %v555 = vadd.f32 %v492, %v411
    %v556 = vadd.f32 %v492, %v412
    %v557 = vadd.f32 %v492, %v413
    %558 = vset.pattern.permute.xlu0 1
    %559 = vperm.xlu0 %558, %v222
    %v560 = vpop.permute.xlu0 %559
    %562 = vset.pattern.permute.xlu0 1
    %563 = vperm.xlu0 %562, %v223
    %v564 = vpop.permute.xlu0 %563
    %566 = vset.pattern.permute.xlu0 1
    %567 = vperm.xlu0 %566, %v224
    %v568 = vpop.permute.xlu0 %567
    %570 = vset.pattern.permute.xlu0 1
    %571 = vperm.xlu0 %570, %v225
    %v572 = vpop.permute.xlu0 %571
    %574 = vset.pattern.permute.xlu0 1
    %575 = vperm.xlu0 %574, %v226
    %v576 = vpop.permute.xlu0 %575
    %578 = vset.pattern.permute.xlu0 1
    %579 = vperm.xlu0 %578, %v227
    %v580 = vpop.permute.xlu0 %579
    %582 = vset.pattern.permute.xlu0 1
    %583 = vperm.xlu0 %582, %v228
    %v584 = vpop.permute.xlu0 %583
    %586 = vset.pattern.permute.xlu0 1
    %587 = vperm.xlu0 %586, %v229
    %v588 = vpop.permute.xlu0 %587
    %590 = vset.pattern.permute.xlu0 1
    %591 = vperm.xlu0 %590, %v230
    %v592 = vpop.permute.xlu0 %591
    %594 = vset.pattern.permute.xlu0 1
    %595 = vperm.xlu0 %594, %v231
    %v596 = vpop.permute.xlu0 %595
    %598 = vset.pattern.permute.xlu0 1
    %599 = vperm.xlu0 %598, %v232
    %v600 = vpop.permute.xlu0 %599
    %602 = vset.pattern.permute.xlu0 1
    %603 = vperm.xlu0 %602, %v233
    %v604 = vpop.permute.xlu0 %603
    %606 = vset.pattern.permute.xlu0 1
    %607 = vperm.xlu0 %606, %v234
    %v608 = vpop.permute.xlu0 %607
    %610 = vset.pattern.permute.xlu0 1
    %611 = vperm.xlu0 %610, %v235
    %v612 = vpop.permute.xlu0 %611
    %614 = vset.pattern.permute.xlu0 1
    %615 = vperm.xlu0 %614, %v236
    %v616 = vpop.permute.xlu0 %615
    %618 = vset.pattern.permute.xlu0 1
    %619 = vperm.xlu0 %618, %v237
    %v620 = vpop.permute.xlu0 %619
    %v622 = vlaneseq
    %v623 = vshrl.u32 %v622, 7
    %v624 = vsub.s32 1, %v623
    %v625 = vrot.slane %v110, %v624
    %v626 = vlaneseq
    %v627 = vshrl.u32 %v626, 7
    %v628 = vsub.s32 1, %v627
    %v629 = vrot.slane %v142, %v628
    %v630 = vlaneseq
    %v631 = vshrl.u32 %v630, 7
    %v632 = vsub.s32 1, %v631
    %v633 = vrot.slane %v174, %v632
    %v634 = vlaneseq
    %v635 = vshrl.u32 %v634, 7
    %v636 = vsub.s32 1, %v635
    %v637 = vrot.slane %v206, %v636
    %v638 = vmul.f32 %v560, %v625
    %v639 = vmul.f32 %v560, %v629
    %v640 = vmul.f32 %v560, %v633
    %v641 = vmul.f32 %v560, %v637
    %v642 = vmul.f32 %v564, %v625
    %v643 = vmul.f32 %v564, %v629
    %v644 = vmul.f32 %v564, %v633
    %v645 = vmul.f32 %v564, %v637
    %v646 = vmul.f32 %v568, %v625
    %v647 = vmul.f32 %v568, %v629
    %v648 = vmul.f32 %v568, %v633
    %v649 = vmul.f32 %v568, %v637
    %v650 = vmul.f32 %v572, %v625
    %v651 = vmul.f32 %v572, %v629
    %v652 = vmul.f32 %v572, %v633
    %v653 = vmul.f32 %v572, %v637
    %v654 = vmul.f32 %v576, %v625
    %v655 = vmul.f32 %v576, %v629
    %v656 = vmul.f32 %v576, %v633
    %v657 = vmul.f32 %v576, %v637
    %v658 = vmul.f32 %v580, %v625
    %v659 = vmul.f32 %v580, %v629
    %v660 = vmul.f32 %v580, %v633
    %v661 = vmul.f32 %v580, %v637
    %v662 = vmul.f32 %v584, %v625
    %v663 = vmul.f32 %v584, %v629
    %v664 = vmul.f32 %v584, %v633
    %v665 = vmul.f32 %v584, %v637
    %v666 = vmul.f32 %v588, %v625
    %v667 = vmul.f32 %v588, %v629
    %v668 = vmul.f32 %v588, %v633
    %v669 = vmul.f32 %v588, %v637
    %v670 = vmul.f32 %v592, %v625
    %v671 = vmul.f32 %v592, %v629
    %v672 = vmul.f32 %v592, %v633
    %v673 = vmul.f32 %v592, %v637
    %v674 = vmul.f32 %v596, %v625
    %v675 = vmul.f32 %v596, %v629
    %v676 = vmul.f32 %v596, %v633
    %v677 = vmul.f32 %v596, %v637
    %v678 = vmul.f32 %v600, %v625
    %v679 = vmul.f32 %v600, %v629
    %v680 = vmul.f32 %v600, %v633
    %v681 = vmul.f32 %v600, %v637
    %v682 = vmul.f32 %v604, %v625
    %v683 = vmul.f32 %v604, %v629
    %v684 = vmul.f32 %v604, %v633
    %v685 = vmul.f32 %v604, %v637
    %v686 = vmul.f32 %v608, %v625
    %v687 = vmul.f32 %v608, %v629
    %v688 = vmul.f32 %v608, %v633
    %v689 = vmul.f32 %v608, %v637
    %v690 = vmul.f32 %v612, %v625
    %v691 = vmul.f32 %v612, %v629
    %v692 = vmul.f32 %v612, %v633
    %v693 = vmul.f32 %v612, %v637
    %v694 = vmul.f32 %v616, %v625
    %v695 = vmul.f32 %v616, %v629
    %v696 = vmul.f32 %v616, %v633
    %v697 = vmul.f32 %v616, %v637
    %v698 = vmul.f32 %v620, %v625
    %v699 = vmul.f32 %v620, %v629
    %v700 = vmul.f32 %v620, %v633
    %v701 = vmul.f32 %v620, %v637
    %v702 = vadd.f32 %v494, %v638
    %v703 = vadd.f32 %v495, %v639
    %v704 = vadd.f32 %v496, %v640
    %v705 = vadd.f32 %v497, %v641
    %v706 = vadd.f32 %v498, %v642
    %v707 = vadd.f32 %v499, %v643
    %v708 = vadd.f32 %v500, %v644
    %v709 = vadd.f32 %v501, %v645
    %v710 = vadd.f32 %v502, %v646
    %v711 = vadd.f32 %v503, %v647
    %v712 = vadd.f32 %v504, %v648
    %v713 = vadd.f32 %v505, %v649
    %v714 = vadd.f32 %v506, %v650
    %v715 = vadd.f32 %v507, %v651
    %v716 = vadd.f32 %v508, %v652
    %v717 = vadd.f32 %v509, %v653
    %v718 = vadd.f32 %v510, %v654
    %v719 = vadd.f32 %v511, %v655
    %v720 = vadd.f32 %v512, %v656
    %v721 = vadd.f32 %v513, %v657
    %v722 = vadd.f32 %v514, %v658
    %v723 = vadd.f32 %v515, %v659
    %v724 = vadd.f32 %v516, %v660
    %v725 = vadd.f32 %v517, %v661
    %v726 = vadd.f32 %v518, %v662
    %v727 = vadd.f32 %v519, %v663
    %v728 = vadd.f32 %v520, %v664
    %v729 = vadd.f32 %v521, %v665
    %v730 = vadd.f32 %v522, %v666
    %v731 = vadd.f32 %v523, %v667
    %v732 = vadd.f32 %v524, %v668
    %v733 = vadd.f32 %v525, %v669
    %v734 = vadd.f32 %v526, %v670
    %v735 = vadd.f32 %v527, %v671
    %v736 = vadd.f32 %v528, %v672
    %v737 = vadd.f32 %v529, %v673
    %v738 = vadd.f32 %v530, %v674
    %v739 = vadd.f32 %v531, %v675
    %v740 = vadd.f32 %v532, %v676
    %v741 = vadd.f32 %v533, %v677
    %v742 = vadd.f32 %v534, %v678
    %v743 = vadd.f32 %v535, %v679
    %v744 = vadd.f32 %v536, %v680
    %v745 = vadd.f32 %v537, %v681
    %v746 = vadd.f32 %v538, %v682
    %v747 = vadd.f32 %v539, %v683
    %v748 = vadd.f32 %v540, %v684
    %v749 = vadd.f32 %v541, %v685
    %v750 = vadd.f32 %v542, %v686
    %v751 = vadd.f32 %v543, %v687
    %v752 = vadd.f32 %v544, %v688
    %v753 = vadd.f32 %v545, %v689
    %v754 = vadd.f32 %v546, %v690
    %v755 = vadd.f32 %v547, %v691
    %v756 = vadd.f32 %v548, %v692
    %v757 = vadd.f32 %v549, %v693
    %v758 = vadd.f32 %v550, %v694
    %v759 = vadd.f32 %v551, %v695
    %v760 = vadd.f32 %v552, %v696
    %v761 = vadd.f32 %v553, %v697
    %v762 = vadd.f32 %v554, %v698
    %v763 = vadd.f32 %v555, %v699
    %v764 = vadd.f32 %v556, %v700
    %v765 = vadd.f32 %v557, %v701
    %v766 = vmax.f32 %v702, 0.0
    %v767 = vmax.f32 %v703, 0.0
    %v768 = vmax.f32 %v704, 0.0
    %v769 = vmax.f32 %v705, 0.0
    %v770 = vmax.f32 %v706, 0.0
    %v771 = vmax.f32 %v707, 0.0
    %v772 = vmax.f32 %v708, 0.0
    %v773 = vmax.f32 %v709, 0.0
    %v774 = vmax.f32 %v710, 0.0
    %v775 = vmax.f32 %v711, 0.0
    %v776 = vmax.f32 %v712, 0.0
    %v777 = vmax.f32 %v713, 0.0
    %v778 = vmax.f32 %v714, 0.0
    %v779 = vmax.f32 %v715, 0.0
    %v780 = vmax.f32 %v716, 0.0
    %v781 = vmax.f32 %v717, 0.0
    %v782 = vmax.f32 %v718, 0.0
    %v783 = vmax.f32 %v719, 0.0
    %v784 = vmax.f32 %v720, 0.0
    %v785 = vmax.f32 %v721, 0.0
    %v786 = vmax.f32 %v722, 0.0
    %v787 = vmax.f32 %v723, 0.0
    %v788 = vmax.f32 %v724, 0.0
    %v789 = vmax.f32 %v725, 0.0
    %v790 = vmax.f32 %v726, 0.0
    %v791 = vmax.f32 %v727, 0.0
    %v792 = vmax.f32 %v728, 0.0
    %v793 = vmax.f32 %v729, 0.0
    %v794 = vmax.f32 %v730, 0.0
    %v795 = vmax.f32 %v731, 0.0
    %v796 = vmax.f32 %v732, 0.0
    %v797 = vmax.f32 %v733, 0.0
    %v798 = vmax.f32 %v734, 0.0
    %v799 = vmax.f32 %v735, 0.0
    %v800 = vmax.f32 %v736, 0.0
    %v801 = vmax.f32 %v737, 0.0
    %v802 = vmax.f32 %v738, 0.0
    %v803 = vmax.f32 %v739, 0.0
    %v804 = vmax.f32 %v740, 0.0
    %v805 = vmax.f32 %v741, 0.0
    %v806 = vmax.f32 %v742, 0.0
    %v807 = vmax.f32 %v743, 0.0
    %v808 = vmax.f32 %v744, 0.0
    %v809 = vmax.f32 %v745, 0.0
    %v810 = vmax.f32 %v746, 0.0
    %v811 = vmax.f32 %v747, 0.0
    %v812 = vmax.f32 %v748, 0.0
    %v813 = vmax.f32 %v749, 0.0
    %v814 = vmax.f32 %v750, 0.0
    %v815 = vmax.f32 %v751, 0.0
    %v816 = vmax.f32 %v752, 0.0
    %v817 = vmax.f32 %v753, 0.0
    %v818 = vmax.f32 %v754, 0.0
    %v819 = vmax.f32 %v755, 0.0
    %v820 = vmax.f32 %v756, 0.0
    %v821 = vmax.f32 %v757, 0.0
    %v822 = vmax.f32 %v758, 0.0
    %v823 = vmax.f32 %v759, 0.0
    %v824 = vmax.f32 %v760, 0.0
    %v825 = vmax.f32 %v761, 0.0
    %v826 = vmax.f32 %v762, 0.0
    %v827 = vmax.f32 %v763, 0.0
    %v828 = vmax.f32 %v764, 0.0
    %v829 = vmax.f32 %v765, 0.0
    %v830 = vld [vmem:[%s3] sm:$0xf]
    %v831 = vld [vmem:[%s3 + $0x4] sm:$0xf]
    %v832 = vld [vmem:[%s3 + $0x8] sm:$0xf]
    %v833 = vld [vmem:[%s3 + $0xc] sm:$0xf]
    %v834 = vld [vmem:[%s3 + $0x10] sm:$0xf]
    %v835 = vld [vmem:[%s3 + $0x14] sm:$0xf]
    %v836 = vld [vmem:[%s3 + $0x18] sm:$0xf]
    %v837 = vld [vmem:[%s3 + $0x1c] sm:$0xf]
    %v838 = vpack.c.bf16 %v770, %v766
    %v839 = vpack.c.bf16 %v771, %v767
    %v840 = vpack.c.bf16 %v772, %v768
    %v841 = vpack.c.bf16 %v773, %v769
    %v842 = vpack.c.bf16 %v778, %v774
    %v843 = vpack.c.bf16 %v779, %v775
    %v844 = vpack.c.bf16 %v780, %v776
    %v845 = vpack.c.bf16 %v781, %v777
    %v846 = vpack.c.bf16 %v786, %v782
    %v847 = vpack.c.bf16 %v787, %v783
    %v848 = vpack.c.bf16 %v788, %v784
    %v849 = vpack.c.bf16 %v789, %v785
    %v850 = vpack.c.bf16 %v794, %v790
    %v851 = vpack.c.bf16 %v795, %v791
    %v852 = vpack.c.bf16 %v796, %v792
    %v853 = vpack.c.bf16 %v797, %v793
    %v854 = vpack.c.bf16 %v802, %v798
    %v855 = vpack.c.bf16 %v803, %v799
    %v856 = vpack.c.bf16 %v804, %v800
    %v857 = vpack.c.bf16 %v805, %v801
    %v858 = vpack.c.bf16 %v810, %v806
    %v859 = vpack.c.bf16 %v811, %v807
    %v860 = vpack.c.bf16 %v812, %v808
    %v861 = vpack.c.bf16 %v813, %v809
    %v862 = vpack.c.bf16 %v818, %v814
    %v863 = vpack.c.bf16 %v819, %v815
    %v864 = vpack.c.bf16 %v820, %v816
    %v865 = vpack.c.bf16 %v821, %v817
    %v866 = vpack.c.bf16 %v826, %v822
    %v867 = vpack.c.bf16 %v827, %v823
    %v868 = vpack.c.bf16 %v828, %v824
    %v869 = vpack.c.bf16 %v829, %v825
    %v870 = vld [vmem:[%s4] sm:$0xff]
    %v871 = vld [vmem:[%s4 + $0x8] sm:$0xff]
    %v872 = vld [vmem:[%s4 + $0x10] sm:$0xff]
    %v873 = vld [vmem:[%s4 + $0x18] sm:$0xff]
    %v874 = vld [vmem:[%s4 + $0x20] sm:$0xff]
    %v875 = vld [vmem:[%s4 + $0x28] sm:$0xff]
    %v876 = vld [vmem:[%s4 + $0x30] sm:$0xff]
    %v877 = vld [vmem:[%s4 + $0x38] sm:$0xff]
    %879 = vset.pattern.permute.xlu0 0
    %880 = vperm.xlu0 %879, %v870
    %v881 = vpop.permute.xlu0 %880
    %884 = vset.pattern.permute.xlu0 0
    %885 = vperm.xlu0 %884, %v871
    %v886 = vpop.permute.xlu0 %885
    %889 = vset.pattern.permute.xlu0 0
    %890 = vperm.xlu0 %889, %v872
    %v891 = vpop.permute.xlu0 %890
    %894 = vset.pattern.permute.xlu0 0
    %895 = vperm.xlu0 %894, %v873
    %v896 = vpop.permute.xlu0 %895
    %899 = vset.pattern.permute.xlu0 0
    %900 = vperm.xlu0 %899, %v874
    %v901 = vpop.permute.xlu0 %900
    %904 = vset.pattern.permute.xlu0 0
    %905 = vperm.xlu0 %904, %v875
    %v906 = vpop.permute.xlu0 %905
    %909 = vset.pattern.permute.xlu0 0
    %910 = vperm.xlu0 %909, %v876
    %v911 = vpop.permute.xlu0 %910
    %914 = vset.pattern.permute.xlu0 0
    %915 = vperm.xlu0 %914, %v877
    %v916 = vpop.permute.xlu0 %915
    %v926 = vunpack.c.l.b16 %v830
    %v927 = vunpack.c.l.b16 %v831
    %v928 = vunpack.c.l.b16 %v832
    %v929 = vunpack.c.l.b16 %v833
    %v930 = vunpack.c.l.b16 %v834
    %v931 = vunpack.c.l.b16 %v835
    %v932 = vunpack.c.l.b16 %v836
    %v933 = vunpack.c.l.b16 %v837
    %v934 = vpack.c.b16 %v927, %v926
    %v935 = vpack.c.b16 %v929, %v928
    %v936 = vpack.c.b16 %v931, %v930
    %v937 = vpack.c.b16 %v933, %v932
    %942 = vmatprep.subr.bf16.mxu0 %v839
    %943 = vmatpush1.bf16.msra.mxu0 %v838
    %944 = vmatprep.subr.bf16.mxu0 %v843
    %945 = vmatpush1.bf16.msra.mxu0 %v842
    %946 = vmatprep.subr.bf16.mxu0 %v847
    %947 = vmatpush1.bf16.msra.mxu0 %v846
    %948 = vmatprep.subr.bf16.mxu0 %v851
    %949 = vmatpush1.bf16.msra.mxu0 %v850
    %950 = vmatprep.subr.bf16.mxu0 %v855
    %951 = vmatpush1.bf16.msra.mxu0 %v854
    %952 = vmatprep.subr.bf16.mxu0 %v859
    %953 = vmatpush1.bf16.msra.mxu0 %v858
    %954 = vmatprep.subr.bf16.mxu0 %v863
    %955 = vmatpush1.bf16.msra.mxu0 %v862
    %956 = vmatprep.subr.bf16.mxu0 %v867
    %957 = vmatpush1.bf16.msra.mxu0 %v866
    %958 = vmatprep.subr.bf16.mxu0 0
    %959 = vmatpush1.bf16.msra.mxu0 0
    %960 = vmatprep.subr.bf16.mxu0 0
    %961 = vmatpush1.bf16.msra.mxu0 0
    %962 = vmatprep.subr.bf16.mxu0 0
    %963 = vmatpush1.bf16.msra.mxu0 0
    %964 = vmatprep.subr.bf16.mxu0 0
    %965 = vmatpush1.bf16.msra.mxu0 0
    %966 = vmatprep.subr.bf16.mxu0 0
    %967 = vmatpush1.bf16.msra.mxu0 0
    %968 = vmatprep.subr.bf16.mxu0 0
    %969 = vmatpush1.bf16.msra.mxu0 0
    %970 = vmatprep.subr.bf16.mxu0 0
    %971 = vmatpush1.bf16.msra.mxu0 0
    %972 = vmatprep.subr.bf16.mxu0 0
    %973 = vmatpush1.bf16.msra.mxu0 0
    %974 = vmatprep.mubr.bf16.mxu0 0
    %975 = vmatmul.mubr.bf16.gmra.mrb[0].mxu0 %v934
    %v976 = vpop.f32.mrb[0].mxu0
    %v977 = vadd.f32 %v881, %v976
    %v978 = vpop.f32.mrb[0].mxu0
    %v979 = vadd.f32 %v881, %v978
    %v980 = vpop.f32.mrb[0].mxu0
    %v981 = vadd.f32 %v886, %v980
    %v982 = vpop.f32.mrb[0].mxu0
    %v983 = vadd.f32 %v886, %v982
    %984 = vmatprep.mubr.bf16.mxu0 0
    %985 = vmatmul.mubr.bf16.gmra.mrb[0].mxu0 %v935
    %v986 = vpop.f32.mrb[0].mxu0
    %v987 = vadd.f32 %v891, %v986
    %v988 = vpop.f32.mrb[0].mxu0
    %v989 = vadd.f32 %v891, %v988
    %v990 = vpop.f32.mrb[0].mxu0
    %v991 = vadd.f32 %v896, %v990
    %v992 = vpop.f32.mrb[0].mxu0
    %v993 = vadd.f32 %v896, %v992
    %994 = vmatprep.mubr.bf16.mxu0 0
    %995 = vmatmul.mubr.bf16.gmra.mrb[0].mxu0 %v936
    %v996 = vpop.f32.mrb[0].mxu0
    %v997 = vadd.f32 %v901, %v996
    %v998 = vpop.f32.mrb[0].mxu0
    %v999 = vadd.f32 %v901, %v998
    %v1000 = vpop.f32.mrb[0].mxu0
    %v1001 = vadd.f32 %v906, %v1000
    %v1002 = vpop.f32.mrb[0].mxu0
    %v1003 = vadd.f32 %v906, %v1002
    %1004 = vmatprep.mubr.bf16.mxu0 0
    %1005 = vmatmul.mubr.bf16.gmra.mrb[0].mxu0 %v937
    %v1006 = vpop.f32.mrb[0].mxu0
    %v1007 = vadd.f32 %v911, %v1006
    %v1008 = vpop.f32.mrb[0].mxu0
    %v1009 = vadd.f32 %v911, %v1008
    %v1010 = vpop.f32.mrb[0].mxu0
    %v1011 = vadd.f32 %v916, %v1010
    %v1012 = vpop.f32.mrb[0].mxu0
    %v1013 = vadd.f32 %v916, %v1012
    %1014 = vdwg.mxu0
    %1015 = vmatprep.subr.bf16.mxu0 %v841
    %1016 = vmatpush1.bf16.msra.mxu0 %v840
    %1017 = vmatprep.subr.bf16.mxu0 %v845
    %1018 = vmatpush1.bf16.msra.mxu0 %v844
    %1019 = vmatprep.subr.bf16.mxu0 %v849
    %1020 = vmatpush1.bf16.msra.mxu0 %v848
    %1021 = vmatprep.subr.bf16.mxu0 %v853
    %1022 = vmatpush1.bf16.msra.mxu0 %v852
    %1023 = vmatprep.subr.bf16.mxu0 %v857
    %1024 = vmatpush1.bf16.msra.mxu0 %v856
    %1025 = vmatprep.subr.bf16.mxu0 %v861
    %1026 = vmatpush1.bf16.msra.mxu0 %v860
    %1027 = vmatprep.subr.bf16.mxu0 %v865
    %1028 = vmatpush1.bf16.msra.mxu0 %v864
    %1029 = vmatprep.subr.bf16.mxu0 %v869
    %1030 = vmatpush1.bf16.msra.mxu0 %v868
    %1031 = vmatprep.subr.bf16.mxu0 0
    %1032 = vmatpush1.bf16.msra.mxu0 0
    %1033 = vmatprep.subr.bf16.mxu0 0
    %1034 = vmatpush1.bf16.msra.mxu0 0
    %1035 = vmatprep.subr.bf16.mxu0 0
    %1036 = vmatpush1.bf16.msra.mxu0 0
    %1037 = vmatprep.subr.bf16.mxu0 0
    %1038 = vmatpush1.bf16.msra.mxu0 0
    %1039 = vmatprep.subr.bf16.mxu0 0
    %1040 = vmatpush1.bf16.msra.mxu0 0
    %1041 = vmatprep.subr.bf16.mxu0 0
    %1042 = vmatpush1.bf16.msra.mxu0 0
    %1043 = vmatprep.subr.bf16.mxu0 0
    %1044 = vmatpush1.bf16.msra.mxu0 0
    %1045 = vmatprep.subr.bf16.mxu0 0
    %1046 = vmatpush1.bf16.msra.mxu0 0
    %1047 = vmatprep.mubr.bf16.mxu0 0
    %1048 = vmatmul.mubr.bf16.gmra.mrb[0].mxu0 %v934
    %v1049 = vpop.f32.mrb[0].mxu0
    %v1050 = vadd.f32 %v881, %v1049
    %v1051 = vpop.f32.mrb[0].mxu0
    %v1052 = vadd.f32 %v881, %v1051
    %v1053 = vpop.f32.mrb[0].mxu0
    %v1054 = vadd.f32 %v886, %v1053
    %v1055 = vpop.f32.mrb[0].mxu0
    %v1056 = vadd.f32 %v886, %v1055
    %1057 = vmatprep.mubr.bf16.mxu0 0
    %1058 = vmatmul.mubr.bf16.gmra.mrb[0].mxu0 %v935
    %v1059 = vpop.f32.mrb[0].mxu0
    %v1060 = vadd.f32 %v891, %v1059
    %v1061 = vpop.f32.mrb[0].mxu0
    %v1062 = vadd.f32 %v891, %v1061
    %v1063 = vpop.f32.mrb[0].mxu0
    %v1064 = vadd.f32 %v896, %v1063
    %v1065 = vpop.f32.mrb[0].mxu0
    %v1066 = vadd.f32 %v896, %v1065
    %1067 = vmatprep.mubr.bf16.mxu0 0
    %1068 = vmatmul.mubr.bf16.gmra.mrb[0].mxu0 %v936
    %v1069 = vpop.f32.mrb[0].mxu0
    %v1070 = vadd.f32 %v901, %v1069
    %v1071 = vpop.f32.mrb[0].mxu0
    %v1072 = vadd.f32 %v901, %v1071
    %v1073 = vpop.f32.mrb[0].mxu0
    %v1074 = vadd.f32 %v906, %v1073
    %v1075 = vpop.f32.mrb[0].mxu0
    %v1076 = vadd.f32 %v906, %v1075
    %1077 = vmatprep.mubr.bf16.mxu0 0
    %1078 = vmatmul.mubr.bf16.gmra.mrb[0].mxu0 %v937
    %v1079 = vpop.f32.mrb[0].mxu0
    %v1080 = vadd.f32 %v911, %v1079
    %v1081 = vpop.f32.mrb[0].mxu0
    %v1082 = vadd.f32 %v911, %v1081
    %v1083 = vpop.f32.mrb[0].mxu0
    %v1084 = vadd.f32 %v916, %v1083
    %v1085 = vpop.f32.mrb[0].mxu0
    %v1086 = vadd.f32 %v916, %v1085
    %1087 = vdwg.mxu0
    %v1088 = vmax.f32 %v977, 0.0
    %v1089 = vmax.f32 %v979, 0.0
    %v1090 = vmax.f32 %v1050, 0.0
    %v1091 = vmax.f32 %v1052, 0.0
    %v1092 = vmax.f32 %v981, 0.0
    %v1093 = vmax.f32 %v983, 0.0
    %v1094 = vmax.f32 %v1054, 0.0
    %v1095 = vmax.f32 %v1056, 0.0
    %v1096 = vmax.f32 %v987, 0.0
    %v1097 = vmax.f32 %v989, 0.0
    %v1098 = vmax.f32 %v1060, 0.0
    %v1099 = vmax.f32 %v1062, 0.0
    %v1100 = vmax.f32 %v991, 0.0
    %v1101 = vmax.f32 %v993, 0.0
    %v1102 = vmax.f32 %v1064, 0.0
    %v1103 = vmax.f32 %v1066, 0.0
    %v1104 = vmax.f32 %v997, 0.0
    %v1105 = vmax.f32 %v999, 0.0
    %v1106 = vmax.f32 %v1070, 0.0
    %v1107 = vmax.f32 %v1072, 0.0
    %v1108 = vmax.f32 %v1001, 0.0
    %v1109 = vmax.f32 %v1003, 0.0
    %v1110 = vmax.f32 %v1074, 0.0
    %v1111 = vmax.f32 %v1076, 0.0
    %v1112 = vmax.f32 %v1007, 0.0
    %v1113 = vmax.f32 %v1009, 0.0
    %v1114 = vmax.f32 %v1080, 0.0
    %v1115 = vmax.f32 %v1082, 0.0
    %v1116 = vmax.f32 %v1011, 0.0
    %v1117 = vmax.f32 %v1013, 0.0
    %v1118 = vmax.f32 %v1084, 0.0
    %v1119 = vmax.f32 %v1086, 0.0
    %v1120 = vld [vmem:[%s5] sm:$0xff]
    %v1121 = vld [vmem:[%s5 + $0x8] sm:$0xff]
    %v1122 = vld [vmem:[%s5 + $0x10] sm:$0xff]
    %v1123 = vld [vmem:[%s5 + $0x18] sm:$0xff]
    %v1124 = vld [vmem:[%s5 + $0x20] sm:$0xff]
    %v1125 = vld [vmem:[%s5 + $0x28] sm:$0xff]
    %v1126 = vld [vmem:[%s5 + $0x30] sm:$0xff]
    %v1127 = vld [vmem:[%s5 + $0x38] sm:$0xff]
    %1129 = vset.pattern.permute.xlu0 0
    %1130 = vperm.xlu0 %1129, %v1120
    %v1131 = vpop.permute.xlu0 %1130
    %1134 = vset.pattern.permute.xlu0 0
    %1135 = vperm.xlu0 %1134, %v1121
    %v1136 = vpop.permute.xlu0 %1135
    %1139 = vset.pattern.permute.xlu0 0
    %1140 = vperm.xlu0 %1139, %v1122
    %v1141 = vpop.permute.xlu0 %1140
    %1144 = vset.pattern.permute.xlu0 0
    %1145 = vperm.xlu0 %1144, %v1123
    %v1146 = vpop.permute.xlu0 %1145
    %1149 = vset.pattern.permute.xlu0 0
    %1150 = vperm.xlu0 %1149, %v1124
    %v1151 = vpop.permute.xlu0 %1150
    %1154 = vset.pattern.permute.xlu0 0
    %1155 = vperm.xlu0 %1154, %v1125
    %v1156 = vpop.permute.xlu0 %1155
    %1159 = vset.pattern.permute.xlu0 0
    %1160 = vperm.xlu0 %1159, %v1126
    %v1161 = vpop.permute.xlu0 %1160
    %1164 = vset.pattern.permute.xlu0 0
    %1165 = vperm.xlu0 %1164, %v1127
    %v1166 = vpop.permute.xlu0 %1165
    %v1168 = vmul.f32 %v1131, %v1088
    %v1169 = vmul.f32 %v1131, %v1089
    %v1170 = vmul.f32 %v1131, %v1090
    %v1171 = vmul.f32 %v1131, %v1091
    %v1172 = vmul.f32 %v1136, %v1092
    %v1173 = vmul.f32 %v1136, %v1093
    %v1174 = vmul.f32 %v1136, %v1094
    %v1175 = vmul.f32 %v1136, %v1095
    %v1176 = vmul.f32 %v1141, %v1096
    %v1177 = vmul.f32 %v1141, %v1097
    %v1178 = vmul.f32 %v1141, %v1098
    %v1179 = vmul.f32 %v1141, %v1099
    %v1180 = vmul.f32 %v1146, %v1100
    %v1181 = vmul.f32 %v1146, %v1101
    %v1182 = vmul.f32 %v1146, %v1102
    %v1183 = vmul.f32 %v1146, %v1103
    %v1184 = vmul.f32 %v1151, %v1104
    %v1185 = vmul.f32 %v1151, %v1105
    %v1186 = vmul.f32 %v1151, %v1106
    %v1187 = vmul.f32 %v1151, %v1107
    %v1188 = vmul.f32 %v1156, %v1108
    %v1189 = vmul.f32 %v1156, %v1109
    %v1190 = vmul.f32 %v1156, %v1110
    %v1191 = vmul.f32 %v1156, %v1111
    %v1192 = vmul.f32 %v1161, %v1112
    %v1193 = vmul.f32 %v1161, %v1113
    %v1194 = vmul.f32 %v1161, %v1114
    %v1195 = vmul.f32 %v1161, %v1115
    %v1196 = vmul.f32 %v1166, %v1116
    %v1197 = vmul.f32 %v1166, %v1117
    %v1198 = vmul.f32 %v1166, %v1118
    %v1199 = vmul.f32 %v1166, %v1119
    %v1200 = vadd.f32 %v1168, %v1172
    %v1201 = vadd.f32 %v1200, %v1176
    %v1202 = vadd.f32 %v1201, %v1180
    %v1203 = vadd.f32 %v1202, %v1184
    %v1204 = vadd.f32 %v1203, %v1188
    %v1205 = vadd.f32 %v1204, %v1192
    %v1206 = vadd.f32 %v1205, %v1196
    %v1207 = vrot.slane %v1206, 4
    %v1208 = vadd.f32 %v1206, %v1207
    %v1209 = vrot.slane %v1208, 2
    %v1210 = vadd.f32 %v1208, %v1209
    %v1211 = vrot.slane %v1210, 1
    %v1212 = vadd.f32 %v1210, %v1211
    %v1213 = vadd.f32 %v1169, %v1173
    %v1214 = vadd.f32 %v1213, %v1177
    %v1215 = vadd.f32 %v1214, %v1181
    %v1216 = vadd.f32 %v1215, %v1185
    %v1217 = vadd.f32 %v1216, %v1189
    %v1218 = vadd.f32 %v1217, %v1193
    %v1219 = vadd.f32 %v1218, %v1197
    %v1220 = vrot.slane %v1219, 4
    %v1221 = vadd.f32 %v1219, %v1220
    %v1222 = vrot.slane %v1221, 2
    %v1223 = vadd.f32 %v1221, %v1222
    %v1224 = vrot.slane %v1223, 1
    %v1225 = vadd.f32 %v1223, %v1224
    %v1226 = vadd.f32 %v1170, %v1174
    %v1227 = vadd.f32 %v1226, %v1178
    %v1228 = vadd.f32 %v1227, %v1182
    %v1229 = vadd.f32 %v1228, %v1186
    %v1230 = vadd.f32 %v1229, %v1190
    %v1231 = vadd.f32 %v1230, %v1194
    %v1232 = vadd.f32 %v1231, %v1198
    %v1233 = vrot.slane %v1232, 4
    %v1234 = vadd.f32 %v1232, %v1233
    %v1235 = vrot.slane %v1234, 2
    %v1236 = vadd.f32 %v1234, %v1235
    %v1237 = vrot.slane %v1236, 1
    %v1238 = vadd.f32 %v1236, %v1237
    %v1239 = vadd.f32 %v1171, %v1175
    %v1240 = vadd.f32 %v1239, %v1179
    %v1241 = vadd.f32 %v1240, %v1183
    %v1242 = vadd.f32 %v1241, %v1187
    %v1243 = vadd.f32 %v1242, %v1191
    %v1244 = vadd.f32 %v1243, %v1195
    %v1245 = vadd.f32 %v1244, %v1199
    %v1246 = vrot.slane %v1245, 4
    %v1247 = vadd.f32 %v1245, %v1246
    %v1248 = vrot.slane %v1247, 2
    %v1249 = vadd.f32 %v1247, %v1248
    %v1250 = vrot.slane %v1249, 1
    %v1251 = vadd.f32 %v1249, %v1250
    %v1252 = vld [vmem:[#allocation2] sm:$0x1]
    %1254 = vset.pattern.permute.xlu0 0
    %1255 = vperm.xlu0 %1254, %v1252
    %v1256 = vpop.permute.xlu0 %1255
    %v1258 = vlaneseq
    %v1259 = vshrl.u32 %v1258, 7
    %v1260 = vsub.s32 0, %v1259
    %v1261 = vrot.slane %v1256, %v1260
    %v1262 = vadd.f32 %v1212, %v1261
    %v1263 = vadd.f32 %v1225, %v1261
    %v1264 = vadd.f32 %v1238, %v1261
    %v1265 = vadd.f32 %v1251, %v1261
    %v1270 = vcombine.low %v1262, %v1263
    %v1271 = vcombine.low %v1264, %v1265
    %v1273 = vunpack.c.l.s4 1966171168
    %v1274 = vunpack.c.0.s8 %v1273
    %v1275 = vlaneseq
    %v1276 = vshrl.u32 %v1275, 7
    %v1277 = vsub.s32 %v1274, %v1276
    %v1278 = vrot.slane %v1270, %v1277
    %v1280 = vunpack.c.l.s4 1966171168
    %v1281 = vunpack.c.0.s8 %v1280
    %v1282 = vlaneseq
    %v1283 = vshrl.u32 %v1282, 7
    %v1284 = vsub.s32 %v1281, %v1283
    %v1285 = vrot.slane %v1271, %v1284
    %v1286 = vcombine.low %v1278, %v1285
    %v1288 = vunpack.c.l.s4 1966171168
    %v1289 = vunpack.c.0.s8 %v1288
    %v1290 = vlaneseq
    %v1291 = vshrl.u32 %v1290, 7
    %v1292 = vsub.s32 %v1289, %v1291
    %v1293 = vrot.slane %v1286, %v1292
    %v1295 = vlaneseq
    %vm1296 = vcmp.ge.s32.totalorder %v1295, 0
    %vm1297 = vcmp.lt.s32.totalorder %v1295, 512
    %vm1298 = vmand %vm1296, %vm1297
    %1299 = vst.msk [vmem:[#allocation3] sm:$0xf] %vm1298, %v1293
    // Predicated region
    $region30: #{mlp_forward.1} parent=1 // pred_check
      _
    $region31: #{mlp_forward.1} parent=1 // pred_check_branch
      %1301 = sbr.rel (0) target = $region33
    $region32: #{mlp_forward.1} parent=1 // pred_region
      %s1303 = ssub.s32 64, 64
      %1304 = vsyncadd [#allocation4], %s1303
      %s1306 = sshll.u32 [#allocation3], 4
      %s1307 = int_to_ptr.vmem [resolvable:$true] %s1306
      %1309 = dma.vmem_to_hbm [thread:$0]  %s1307, 64, %s7, [#allocation4]
    $region33: #{mlp_forward.1} parent=1 // pred_fallthru
      _
    // Predicated region
    $region34: #{mlp_forward.1} parent=1 // pred_check
      _
    $region35: #{mlp_forward.1} parent=1 // pred_check_branch
      %1311 = sbr.rel (0) target = $region37
    $region36: #{mlp_forward.1} parent=1 // pred_region
      %1312 = dma.done [#allocation4], 64
    $region37: #{mlp_forward.1} parent=1 // pred_fallthru
      _
    %1313 = vsyncpa [#allocation4], 1

</llo_original>
